<compile_context>
chip_gen: v6e
topology: v6e:2x2x1
jax: 0.10.0
libtpu: 0.0.40
codegen_flags: <defaults>
</compile_context>

<pallas_src>
import functools

import jax
import jax.numpy as jnp
from jax import lax
from jax.experimental import pallas as pl
from jax.experimental.pallas import tpu as pltpu

PAD_TOKEN = -100
_NEG_BIG = -1.0e30


def _round_up(x: int, m: int) -> int:
    return (x + m - 1) // m * m


def _pad2d(a, rows, cols, value=0):
    pr, pc = rows - a.shape[0], cols - a.shape[1]
    if pr or pc:
        a = jnp.pad(a, ((0, pr), (0, pc)), constant_values=value)
    return a


def _tpu_tile_config():
    """Generation-aware tile caps and scoped-VMEM limits.

    Roofline: the W (D x V) stream is re-read once per row tile, so the row
    tile tm sets arithmetic intensity on that stream. v5e knee ~240 -> tm=256;
    v6e knee ~640-720 -> tm=1024; v7x knee ~620 per TC (and W is duplicated
    across the two cores) -> tm=1024 but with a smaller VMEM budget (64 MiB
    physical).
    """
    kind = ""
    try:
        kind = jax.devices()[0].device_kind.lower()
    except Exception:
        pass
    if "v7" in kind:
        return {"tm": 1024, "tn": 512, "vmem": 40 * 1024 * 1024}
    if "v6" in kind:
        return {"tm": 1024, "tn": 1024, "vmem": 96 * 1024 * 1024}
    if "v5 lite" in kind or "v5e" in kind or "v5lite" in kind:
        return {"tm": 256, "tn": 512, "vmem": 64 * 1024 * 1024}
    return {"tm": 512, "tn": 512, "vmem": None}


def _shrink_to_budget(tm, tn, dp, vmem_bytes):
    """Shrink (tm, tn) until the double-buffered blocks fit in the VMEM budget."""
    budget = (vmem_bytes or 32 * 1024 * 1024) - 4 * 1024 * 1024  # headroom

    def usage(tm_, tn_):
        x = 2 * tm_ * dp * 2        # (tm, dp) bf16 activations, double buffered
        w = 2 * dp * tn_ * 2        # (dp, tn) bf16 weights, double buffered
        b = 2 * 8 * tn_ * 4         # (1, tn) f32 bias (sublane padded)
        o = 2 * tm_ * tn_ * 2       # (tm, tn) bf16 logits (labels=None path)
        cols = 9 * tm_ * 128 * 4    # (tm, 1) label/mean/loss blocks + 3 scratches
        return x + w + b + o + cols

    while usage(tm, tn) > budget:
        if tn > 512:
            tn //= 2
        elif tm > 256:
            tm //= 2
        elif tn > 128:
            tn //= 2
        else:
            break
    return tm, tn


# --------------------------------------------------------------------------
# Kernel 1: LM-head projection  logits = x @ W + b   (labels=None path)
# 2-D grid, full-D activation block resident per row tile, bf16 output.
# --------------------------------------------------------------------------
def _lmhead_kernel(x_ref, w_ref, b_ref, o_ref):
    o_ref[...] = (jnp.dot(x_ref[...], w_ref[...],
                          preferred_element_type=jnp.float32)
                  + b_ref[...]).astype(o_ref.dtype)


def project_to_logits(x2d, wb, bb, vocab_size, tm_cap, tn, vmem_bytes):
    """x2d: (N, D) f32; wb: (Dp, Vp) bf16 pre-padded; bb: (1, Vp) f32 pre-padded."""
    n, _ = x2d.shape
    dp, vp = wb.shape
    tm = min(tm_cap, _round_up(max(n, 16), 16))
    np_ = _round_up(n, tm)

    xb = _pad2d(x2d.astype(jnp.bfloat16), np_, dp)
    grid = (np_ // tm, vp // tn)

    out = pl.pallas_call(
        _lmhead_kernel,
        out_shape=jax.ShapeDtypeStruct((np_, vp), jnp.bfloat16),
        grid_spec=pltpu.PrefetchScalarGridSpec(
            num_scalar_prefetch=0,
            grid=grid,
            in_specs=[
                pl.BlockSpec((tm, dp), lambda i, j: (i, 0)),   # x resident per row
                pl.BlockSpec((dp, tn), lambda i, j: (0, j)),   # W streamed
                pl.BlockSpec((1, tn), lambda i, j: (0, j)),    # bias
            ],
            out_specs=pl.BlockSpec((tm, tn), lambda i, j: (i, j)),
        ),
        compiler_params=pltpu.CompilerParams(
            dimension_semantics=("parallel", "parallel"),
            vmem_limit_bytes=vmem_bytes),
        cost_estimate=pl.CostEstimate(
            flops=2 * np_ * dp * vp,
            transcendentals=0,
            bytes_accessed=(np_ * dp * 2 + (np_ // tm) * dp * vp * 2
                            + vp * 4 + np_ * vp * 2)),
    )(xb, wb, bb)
    return out[:n, :vocab_size]


# --------------------------------------------------------------------------
# Kernel 2: FUSED LM-head + cross-entropy (flash-CE, logits never hit HBM)
# matches torch.nn.CrossEntropyLoss(label_smoothing=eps, ignore_index=-100)
# --------------------------------------------------------------------------
def _fused_lmhead_ce_kernel(x_ref, w_ref, b_ref, lbl_ref, mean_ref, loss_ref,
                            m_ref, l_ref, tgt_ref, *, label_smoothing):
    j = pl.program_id(1)
    nj = pl.num_programs(1)

    @pl.when(j == 0)
    def _():
        m_ref[...] = jnp.full_like(m_ref, _NEG_BIG)
        l_ref[...] = jnp.zeros_like(l_ref)
        tgt_ref[...] = jnp.zeros_like(tgt_ref)

    # Full-D MXU matmul for this (row-tile, vocab-tile): logits live only in
    # VMEM/vregs.  Padded vocab columns have W=0 and bias=-1e30, padded hidden
    # dims are zero, so no in-kernel mask is needed and the math stays finite.
    logits = jnp.dot(x_ref[...], w_ref[...],
                     preferred_element_type=jnp.float32) + b_ref[...]
    tm, tn = logits.shape

    # Online logsumexp over vocab tiles.
    m_prev = m_ref[...]
    m_new = jnp.maximum(m_prev, jnp.max(logits, axis=-1, keepdims=True))
    alpha = jnp.exp(m_prev - m_new)
    l_ref[...] = alpha * l_ref[...] + jnp.sum(jnp.exp(logits - m_new),
                                              axis=-1, keepdims=True)
    m_ref[...] = m_new

    # Target logit (labels never index padded columns; PAD_TOKEN never matches).
    col = j * tn + lax.broadcasted_iota(jnp.int32, (tm, tn), 1)
    tgt_ref[...] += jnp.sum(jnp.where(col == lbl_ref[...], logits, 0.0),
                            axis=-1, keepdims=True)

    # Finalize per-token loss for this row tile.
    @pl.when(j == nj - 1)
    def _():
        lse = m_ref[...] + jnp.log(l_ref[...])
        nll = lse - tgt_ref[...]                 # -log p_y
        smooth = lse - mean_ref[...]             # mean-of-logits hoisted to wrapper
        per_tok = (1.0 - label_smoothing) * nll + label_smoothing * smooth
        loss_ref[...] = jnp.where(lbl_ref[...] != PAD_TOKEN, per_tok, 0.0)


def fused_lmhead_cross_entropy(x2d, labels1d, wb, bb, w_rowsum, b_sum,
                               vocab_size, label_smoothing,
                               tm_cap, tn, vmem_bytes):
    n, _ = x2d.shape
    dp, vp = wb.shape
    tm = min(tm_cap, _round_up(max(n, 16), 16))
    np_ = _round_up(n, tm)

    xb = _pad2d(x2d.astype(jnp.bfloat16), np_, dp)
    lbl = _pad2d(labels1d.reshape(n, 1).astype(jnp.int32), np_, 1,
                 value=PAD_TOKEN)

    # Label-smoothing reduction hoisted out of the kernel:
    #   sum_c logits[r, c] = x[r, :] @ rowsum(W) + sum(b)
    xf = x2d.astype(jnp.bfloat16).astype(jnp.float32)
    mean_logits = (xf @ w_rowsum + b_sum) * (1.0 / vocab_size)
    mean_logits = _pad2d(mean_logits.reshape(n, 1).astype(jnp.float32), np_, 1)

    grid = (np_ // tm, vp // tn)
    kernel = functools.partial(_fused_lmhead_ce_kernel,
                               label_smoothing=float(label_smoothing))

    per_tok = pl.pallas_call(
        kernel,
        out_shape=jax.ShapeDtypeStruct((np_, 1), jnp.float32),
        grid_spec=pltpu.PrefetchScalarGridSpec(
            num_scalar_prefetch=0,
            grid=grid,
            in_specs=[
                pl.BlockSpec((tm, dp), lambda i, j: (i, 0)),   # x: resident per row tile
                pl.BlockSpec((dp, tn), lambda i, j: (0, j)),   # W: streamed once per row tile
                pl.BlockSpec((1, tn), lambda i, j: (0, j)),    # bias (pad cols = -1e30)
                pl.BlockSpec((tm, 1), lambda i, j: (i, 0)),    # labels
                pl.BlockSpec((tm, 1), lambda i, j: (i, 0)),    # precomputed mean-of-logits
            ],
            out_specs=pl.BlockSpec((tm, 1), lambda i, j: (i, 0)),
            scratch_shapes=[
                pltpu.VMEM((tm, 1), jnp.float32),   # running max
                pltpu.VMEM((tm, 1), jnp.float32),   # running sum of exp
                pltpu.VMEM((tm, 1), jnp.float32),   # target logit
            ],
        ),
        compiler_params=pltpu.CompilerParams(
            dimension_semantics=("parallel", "arbitrary"),
            vmem_limit_bytes=vmem_bytes),
        cost_estimate=pl.CostEstimate(
            flops=2 * np_ * dp * vp,
            transcendentals=np_ * vp,
            bytes_accessed=(np_ * dp * 2 + (np_ // tm) * dp * vp * 2
                            + vp * 4 + np_ * 4 * 3)),
    )(xb, wb, bb, lbl, mean_logits)

    per_tok = per_tok[:n, 0]
    valid = (labels1d != PAD_TOKEN).astype(jnp.float32)
    # mean over non-ignored tokens; NaN if every label is ignored (torch parity)
    return jnp.sum(per_tok) / jnp.sum(valid)


# --------------------------------------------------------------------------
# JAX analogue of BaseTransformerBackbone
# --------------------------------------------------------------------------
class PallasTransformerBackbone:
    """Mirror of BaseTransformerBackbone.forward."""
    # TODO(synk): load_model_and_tokenizer / tokenize_labels /
    # translate_embeddings are abstract in the reference module; they are
    # synthesized as a deterministic linear LM head + pre-tokenized int labels.

    def __init__(self, label_smoothing: float, max_length: int,
                 d_model: int, vocab_size: int) -> None:
        self.label_smoothing = label_smoothing
        self.max_length = max_length
        self.pad_token = PAD_TOKEN
        self.d_model = d_model
        self.vocab_size = vocab_size

        kw = jax.random.PRNGKey(42)
        self.w = (jax.random.normal(kw, (d_model, vocab_size), jnp.float32)
                  / jnp.sqrt(jnp.float32(d_model)))
        self.b = jnp.zeros((1, vocab_size), jnp.float32)

        cfg = _tpu_tile_config()
        dp = _round_up(d_model, 128)
        tn = min(cfg["tn"], _round_up(vocab_size, 128))
        tm_cap, tn = _shrink_to_budget(cfg["tm"], tn, dp, cfg["vmem"])
        vp = _round_up(vocab_size, tn)
        self._tm_cap, self._tn, self._vmem = tm_cap, tn, cfg["vmem"]

        # Weights cast to bf16 and padded ONCE (review: per-call astype+pad of
        # W costs ~D*V*6 bytes of extra HBM traffic before every kernel launch).
        self.wb = _pad2d(self.w.astype(jnp.bfloat16), dp, vp)
        # Padded vocab columns carry a huge negative bias so they never
        # contribute to softmax / target selection -> no in-kernel mask.
        self.bb = _pad2d(self.b.astype(jnp.float32), 1, vp, value=_NEG_BIG)
        # Hoisted label-smoothing term: sum_c logits = x @ rowsum(W) + sum(b).
        wf = self.w.astype(jnp.bfloat16).astype(jnp.float32)
        self.w_rowsum = jnp.sum(wf, axis=1)                  # (D,)
        self.b_sum = jnp.sum(self.b).astype(jnp.float32)

    def augment_embeddings(self, embeddings, attention_mask):
        return embeddings, attention_mask

    def translate_embeddings(self, inputs_embeds, attention_mask, labels=None):
        B, S, D = inputs_embeds.shape
        logits2d = project_to_logits(inputs_embeds.reshape(B * S, D),
                                     self.wb, self.bb, self.vocab_size,
                                     self._tm_cap, self._tn, self._vmem)
        return logits2d.reshape(B, S, self.vocab_size)

    def forward(self, embeddings, attention_mask, labels=None):
        aug_emb, aug_mask = self.augment_embeddings(embeddings, attention_mask)
        if labels is not None:
            # Fused LM-head + cross-entropy: logits never materialized in HBM.
            B, S, D = aug_emb.shape
            loss = fused_lmhead_cross_entropy(
                aug_emb.reshape(B * S, D), labels.reshape(-1),
                self.wb, self.bb, self.w_rowsum, self.b_sum,
                self.vocab_size, self.label_smoothing,
                self._tm_cap, self._tn, self._vmem)
        else:
            # Perf review: the torch reference computes logits here and then
            # discards them; the synthetic LM head is pure, so the dead matmul
            # is skipped (use translate_embeddings() if logits are needed).
            loss = None
        return {"loss": loss,
                "inputs_embeds": aug_emb,
                "attention_mask": aug_mask}


# --------------------------------------------------------------------------
# Pure-JAX reference for correctness checking
# --------------------------------------------------------------------------
def _ref_ce(logits2d, labels1d, eps):
    lse = jax.nn.logsumexp(logits2d, axis=-1)
    safe = jnp.where(labels1d == PAD_TOKEN, 0, labels1d)
    tgt = jnp.take_along_axis(logits2d, safe[:, None], axis=-1)[:, 0]
    nll = lse - tgt
    smooth = lse - jnp.mean(logits2d, axis=-1)
    per = (1.0 - eps) * nll + eps * smooth
    valid = labels1d != PAD_TOKEN
    return jnp.sum(jnp.where(valid, per, 0.0)) / jnp.sum(valid.astype(jnp.float32))


if __name__ == "__main__":
    B, S, D, V = 2, 8, 32, 128
    label_smoothing = 0.1

    key = jax.random.PRNGKey(0)
    k_emb, k_lab = jax.random.split(key)
    embeddings = jax.random.normal(k_emb, (B, S, D), jnp.float32)
    attention_mask = jnp.ones((B, S), jnp.int32)
    labels = jax.random.randint(k_lab, (B, S), 0, V, jnp.int32)
    labels = labels.at[:, -2:].set(PAD_TOKEN)   # some ignored (padding) tokens

    model = PallasTransformerBackbone(label_smoothing, S, D, V)

    # fused path (labels provided)
    out = model.forward(embeddings, attention_mask, labels=labels)
    loss = jax.block_until_ready(out["loss"])
    jax.block_until_ready(out["inputs_embeds"])
    jax.block_until_ready(out["attention_mask"])

    # labels=None path (no dead LM-head matmul)
    out_nl = model.forward(embeddings, attention_mask, labels=None)
    assert out_nl["loss"] is None
    jax.block_until_ready(out_nl["inputs_embeds"])

    # --- correctness cross-check (reference uses the same bf16-cast inputs) ---
    xf = embeddings.reshape(-1, D).astype(jnp.bfloat16).astype(jnp.float32)
    wf = model.w.astype(jnp.bfloat16).astype(jnp.float32)
    ref_logits = xf @ wf + model.b
    ref_loss = _ref_ce(ref_logits, labels.reshape(-1), label_smoothing)
    assert jnp.allclose(loss, ref_loss, rtol=1e-4, atol=1e-4), (loss, ref_loss)

    # logits-only kernel check (bf16 output -> bf16-level tolerance)
    kern_logits = model.translate_embeddings(embeddings, attention_mask)
    kern_logits = jax.block_until_ready(kern_logits).astype(jnp.float32)
    assert jnp.allclose(kern_logits.reshape(-1, V), ref_logits,
                        rtol=2e-2, atol=2e-2)

    print("KERNEL_OK")
</pallas_src>

<mosaic_0001>
module attributes {stable_mosaic.version = 11 : i64} {
  func.func @_fused_lmhead_ce_kernel(%arg0: i32, %arg1: i32, %arg2: memref<16x128xbf16, #tpu.memory_space<vmem>>, %arg3: memref<128x128xbf16, #tpu.memory_space<vmem>>, %arg4: memref<1x128xf32, #tpu.memory_space<vmem>>, %arg5: memref<16x1xi32, #tpu.memory_space<vmem>>, %arg6: memref<16x1xf32, #tpu.memory_space<vmem>>, %arg7: memref<16x1xf32, #tpu.memory_space<vmem>>, %arg8: memref<16x1xf32, #tpu.memory_space<vmem>>, %arg9: memref<16x1xf32, #tpu.memory_space<vmem>>, %arg10: memref<16x1xf32, #tpu.memory_space<vmem>>) attributes {dimension_semantics = [#tpu.dimension_semantics<parallel>, #tpu.dimension_semantics<arbitrary>], iteration_bounds = array<i64: 1, 1>, scalar_prefetch = 0 : i64, scratch_operands = 3 : i64, tpu.core_type = #tpu.core_type<tc>, window_params = [{transform_indices = @transform_0, window_bounds = array<i64: 16, 128>}, {transform_indices = @transform_1, window_bounds = array<i64: 128, 128>}, {transform_indices = @transform_2, window_bounds = array<i64: 1, 128>}, {transform_indices = @transform_3, window_bounds = array<i64: 16, 1>}, {transform_indices = @transform_4, window_bounds = array<i64: 16, 1>}, {transform_indices = @transform_5, window_bounds = array<i64: 16, 1>}]} {
    %c0_i32 = arith.constant 0 : i32
    %0 = arith.cmpi eq, %arg1, %c0_i32 : i32
    %1 = arith.extui %0 : i1 to i32
    %c0_i32_0 = arith.constant 0 : i32
    %2 = arith.cmpi ne, %1, %c0_i32_0 : i32
    scf.if %2 {
      %cst_26 = arith.constant -1.000000e+30 : f32
      %42 = vector.broadcast %cst_26 : f32 to vector<16x1xf32>
      %c0_27 = arith.constant 0 : index
      %c0_28 = arith.constant 0 : index
      %43 = vector.load %arg8[%c0_27, %c0_28] : memref<16x1xf32, #tpu.memory_space<vmem>>, vector<16x1xf32>
      tpu.vector_store %arg8[%c0_27, %c0_28], %42 {strides = array<i32>} : memref<16x1xf32, #tpu.memory_space<vmem>>, vector<16x1xf32>,
      %cst_29 = arith.constant 0.000000e+00 : f32
      %44 = vector.broadcast %cst_29 : f32 to vector<16x1xf32>
      %c0_30 = arith.constant 0 : index
      %c0_31 = arith.constant 0 : index
      %45 = vector.load %arg9[%c0_30, %c0_31] : memref<16x1xf32, #tpu.memory_space<vmem>>, vector<16x1xf32>
      tpu.vector_store %arg9[%c0_30, %c0_31], %44 {strides = array<i32>} : memref<16x1xf32, #tpu.memory_space<vmem>>, vector<16x1xf32>,
      %cst_32 = arith.constant 0.000000e+00 : f32
      %46 = vector.broadcast %cst_32 : f32 to vector<16x1xf32>
      %c0_33 = arith.constant 0 : index
      %c0_34 = arith.constant 0 : index
      %47 = vector.load %arg10[%c0_33, %c0_34] : memref<16x1xf32, #tpu.memory_space<vmem>>, vector<16x1xf32>
      tpu.vector_store %arg10[%c0_33, %c0_34], %46 {strides = array<i32>} : memref<16x1xf32, #tpu.memory_space<vmem>>, vector<16x1xf32>,
    } else {
    }
    %c0 = arith.constant 0 : index
    %c0_1 = arith.constant 0 : index
    %3 = vector.load %arg2[%c0, %c0_1] : memref<16x128xbf16, #tpu.memory_space<vmem>>, vector<16x128xbf16>
    %c0_2 = arith.constant 0 : index
    %c0_3 = arith.constant 0 : index
    %4 = vector.load %arg3[%c0_2, %c0_3] : memref<128x128xbf16, #tpu.memory_space<vmem>>, vector<128x128xbf16>
    %cst = arith.constant dense<0.000000e+00> : vector<16x128xf32>
    %5 = tpu.matmul %3, %4, %cst {dimension_numbers = #tpu.dot_dimension_numbers<[1], [0], [0], [1], [0, 0, 1, 1], [], []>} : vector<16x128xbf16>, vector<128x128xbf16>, vector<16x128xf32> -> vector<16x128xf32>
    %c0_4 = arith.constant 0 : index
    %c0_5 = arith.constant 0 : index
    %6 = vector.load %arg4[%c0_4, %c0_5] : memref<1x128xf32, #tpu.memory_space<vmem>>, vector<1x128xf32>
    %7 = vector.broadcast %6 : vector<1x128xf32> to vector<16x128xf32>
    %8 = arith.addf %5, %7 : vector<16x128xf32>
    %c0_6 = arith.constant 0 : index
    %c0_7 = arith.constant 0 : index
    %9 = vector.load %arg8[%c0_6, %c0_7] : memref<16x1xf32, #tpu.memory_space<vmem>>, vector<16x1xf32>
    %cst_8 = arith.constant dense<0xFF800000> : vector<16xf32>
    %10 = vector.multi_reduction <maximumf>, %8, %cst_8 [1] : vector<16x128xf32> to vector<16xf32>
    %11 = vector.shape_cast %10 : vector<16xf32> to vector<16x1xf32>
    %12 = arith.maximumf %9, %11 : vector<16x1xf32>
    %13 = arith.subf %9, %12 : vector<16x1xf32>
    %14 = math.exp %13 : vector<16x1xf32>
    %c0_9 = arith.constant 0 : index
    %c0_10 = arith.constant 0 : index
    %15 = vector.load %arg9[%c0_9, %c0_10] : memref<16x1xf32, #tpu.memory_space<vmem>>, vector<16x1xf32>
    %16 = arith.mulf %14, %15 : vector<16x1xf32>
    %17 = vector.broadcast %12 : vector<16x1xf32> to vector<16x128xf32>
    %18 = arith.subf %8, %17 : vector<16x128xf32>
    %19 = math.exp %18 : vector<16x128xf32>
    %cst_11 = arith.constant dense<0.000000e+00> : vector<16xf32>
    %20 = vector.multi_reduction <add>, %19, %cst_11 [1] : vector<16x128xf32> to vector<16xf32>
    %21 = vector.shape_cast %20 : vector<16xf32> to vector<16x1xf32>
    %22 = arith.addf %16, %21 : vector<16x1xf32>
    %c0_12 = arith.constant 0 : index
    %c0_13 = arith.constant 0 : index
    %23 = vector.load %arg9[%c0_12, %c0_13] : memref<16x1xf32, #tpu.memory_space<vmem>>, vector<16x1xf32>
    tpu.vector_store %arg9[%c0_12, %c0_13], %22 {strides = array<i32>} : memref<16x1xf32, #tpu.memory_space<vmem>>, vector<16x1xf32>,
    %c0_14 = arith.constant 0 : index
    %c0_15 = arith.constant 0 : index
    %24 = vector.load %arg8[%c0_14, %c0_15] : memref<16x1xf32, #tpu.memory_space<vmem>>, vector<16x1xf32>
    tpu.vector_store %arg8[%c0_14, %c0_15], %12 {strides = array<i32>} : memref<16x1xf32, #tpu.memory_space<vmem>>, vector<16x1xf32>,
    %c128_i32 = arith.constant 128 : i32
    %25 = arith.muli %arg1, %c128_i32 : i32
    %26 = tpu.iota {dimensions = array<i32: 1>} : vector<16x128xi32>
    %27 = vector.broadcast %25 : i32 to vector<16x128xi32>
    %28 = arith.addi %27, %26 : vector<16x128xi32>
    %c0_16 = arith.constant 0 : index
    %c0_17 = arith.constant 0 : index
    %29 = vector.load %arg10[%c0_16, %c0_17] : memref<16x1xf32, #tpu.memory_space<vmem>>, vector<16x1xf32>
    %c0_18 = arith.constant 0 : index
    %c0_19 = arith.constant 0 : index
    %30 = vector.load %arg5[%c0_18, %c0_19] : memref<16x1xi32, #tpu.memory_space<vmem>>, vector<16x1xi32>
    %31 = vector.broadcast %30 : vector<16x1xi32> to vector<16x128xi32>
    %32 = arith.cmpi eq, %28, %31 : vector<16x128xi32>
    %cst_20 = arith.constant 0.000000e+00 : f32
    %33 = vector.broadcast %cst_20 : f32 to vector<16x128xf32>
    %34 = arith.select %32, %8, %33 : vector<16x128xi1>, vector<16x128xf32>
    %cst_21 = arith.constant dense<0.000000e+00> : vector<16xf32>
    %35 = vector.multi_reduction <add>, %34, %cst_21 [1] : vector<16x128xf32> to vector<16xf32>
    %36 = vector.shape_cast %35 : vector<16xf32> to vector<16x1xf32>
    %37 = arith.addf %29, %36 : vector<16x1xf32>
    %c0_22 = arith.constant 0 : index
    %c0_23 = arith.constant 0 : index
    %38 = vector.load %arg10[%c0_22, %c0_23] : memref<16x1xf32, #tpu.memory_space<vmem>>, vector<16x1xf32>
    tpu.vector_store %arg10[%c0_22, %c0_23], %37 {strides = array<i32>} : memref<16x1xf32, #tpu.memory_space<vmem>>, vector<16x1xf32>,
    %c0_i32_24 = arith.constant 0 : i32
    %39 = arith.cmpi eq, %arg1, %c0_i32_24 : i32
    %40 = arith.extui %39 : i1 to i32
    %c0_i32_25 = arith.constant 0 : i32
    %41 = arith.cmpi ne, %40, %c0_i32_25 : i32
    scf.if %41 {
      %c0_26 = arith.constant 0 : index
      %c0_27 = arith.constant 0 : index
      %42 = vector.load %arg8[%c0_26, %c0_27] : memref<16x1xf32, #tpu.memory_space<vmem>>, vector<16x1xf32>
      %c0_28 = arith.constant 0 : index
      %c0_29 = arith.constant 0 : index
      %43 = vector.load %arg9[%c0_28, %c0_29] : memref<16x1xf32, #tpu.memory_space<vmem>>, vector<16x1xf32>
      %44 = math.log %43 : vector<16x1xf32>
      %45 = arith.addf %42, %44 : vector<16x1xf32>
      %c0_30 = arith.constant 0 : index
      %c0_31 = arith.constant 0 : index
      %46 = vector.load %arg10[%c0_30, %c0_31] : memref<16x1xf32, #tpu.memory_space<vmem>>, vector<16x1xf32>
      %47 = arith.subf %45, %46 : vector<16x1xf32>
      %c0_32 = arith.constant 0 : index
      %c0_33 = arith.constant 0 : index
      %48 = vector.load %arg6[%c0_32, %c0_33] : memref<16x1xf32, #tpu.memory_space<vmem>>, vector<16x1xf32>
      %49 = arith.subf %45, %48 : vector<16x1xf32>
      %cst_34 = arith.constant 0.899999976 : f32
      %50 = vector.broadcast %cst_34 : f32 to vector<16x1xf32>
      %51 = arith.mulf %50, %47 : vector<16x1xf32>
      %cst_35 = arith.constant 1.000000e-01 : f32
      %52 = vector.broadcast %cst_35 : f32 to vector<16x1xf32>
      %53 = arith.mulf %52, %49 : vector<16x1xf32>
      %54 = arith.addf %51, %53 : vector<16x1xf32>
      %c0_36 = arith.constant 0 : index
      %c0_37 = arith.constant 0 : index
      %55 = vector.load %arg5[%c0_36, %c0_37] : memref<16x1xi32, #tpu.memory_space<vmem>>, vector<16x1xi32>
      %c-100_i32 = arith.constant -100 : i32
      %56 = vector.broadcast %c-100_i32 : i32 to vector<16x1xi32>
      %57 = arith.cmpi ne, %55, %56 : vector<16x1xi32>
      %cst_38 = arith.constant 0.000000e+00 : f32
      %58 = vector.broadcast %cst_38 : f32 to vector<16x1xf32>
      %59 = arith.select %57, %54, %58 : vector<16x1xi1>, vector<16x1xf32>
      %c0_39 = arith.constant 0 : index
      %c0_40 = arith.constant 0 : index
      %60 = vector.load %arg7[%c0_39, %c0_40] : memref<16x1xf32, #tpu.memory_space<vmem>>, vector<16x1xf32>
      tpu.vector_store %arg7[%c0_39, %c0_40], %59 {strides = array<i32>} : memref<16x1xf32, #tpu.memory_space<vmem>>, vector<16x1xf32>,
    } else {
    }
    return
  }
  func.func @transform_0(%arg0: i32, %arg1: i32) -> (i32, i32) {
    %c0_i32 = arith.constant 0 : i32
    %c0_i32_0 = arith.constant 0 : i32
    return %arg0, %c0_i32 : i32, i32
  }
  func.func @transform_1(%arg0: i32, %arg1: i32) -> (i32, i32) {
    %c0_i32 = arith.constant 0 : i32
    %c0_i32_0 = arith.constant 0 : i32
    return %c0_i32, %arg1 : i32, i32
  }
  func.func @transform_2(%arg0: i32, %arg1: i32) -> (i32, i32) {
    %c0_i32 = arith.constant 0 : i32
    %c0_i32_0 = arith.constant 0 : i32
    return %c0_i32, %arg1 : i32, i32
  }
  func.func @transform_3(%arg0: i32, %arg1: i32) -> (i32, i32) {
    %c0_i32 = arith.constant 0 : i32
    %c0_i32_0 = arith.constant 0 : i32
    return %arg0, %c0_i32 : i32, i32
  }
  func.func @transform_4(%arg0: i32, %arg1: i32) -> (i32, i32) {
    %c0_i32 = arith.constant 0 : i32
    %c0_i32_0 = arith.constant 0 : i32
    return %arg0, %c0_i32 : i32, i32
  }
  func.func @transform_5(%arg0: i32, %arg1: i32) -> (i32, i32) {
    %c0_i32 = arith.constant 0 : i32
    %c0_i32_0 = arith.constant 0 : i32
    return %arg0, %c0_i32 : i32, i32
  }
}

</mosaic_0001>

<llo_original>
// kernel: tpu_custom_call.1
$region0: #{tpu_custom_call.1}
  #allocation0 [shape = 'u32[]', space=smem, size = 0x4, offset = 0x4, fixed_abs, tag = 'smem constant byte address 0x4 - core index']
  #allocation1 [shape = 'u32[144,128]{1,0:T(1,128)}', space=vmem, size = 0x12000, scoped, tag = 'internal scratch']
  #allocation2 [shape = 'f32[16,1]{1,0:T(8,128)}', space=vmem, size = 0x2000, scoped, tag = 'scratch operand']
  #allocation3 [shape = 'f32[16,1]{1,0:T(8,128)}', space=vmem, size = 0x2000, scoped, tag = 'scratch operand']
  #allocation4 [shape = 'f32[16,1]{1,0:T(8,128)}', space=vmem, size = 0x2000, scoped, tag = 'scratch operand']
  %s0 = inlined_call_operand.vmem [shape: bf16[16,128], index: 0, kind: input, shape index: {}]
  %s1 = inlined_call_operand.hbm [shape: bf16[128,128], index: 1, kind: input, shape index: {}]
  %s2 = inlined_call_operand.vmem [shape: f32[1,128], index: 2, kind: input, shape index: {}]
  %s3 = inlined_call_operand.vmem [shape: s32[16,1], index: 3, kind: input, shape index: {}]
  %s4 = inlined_call_operand.vmem [shape: f32[16,1], index: 4, kind: input, shape index: {}]
  %s5 = inlined_call_operand.vmem [shape: f32[16,1], index: 5, kind: output, shape index: {}]
  %s6 = sld [smem:[#allocation0]]
  $region42: #{tpu_custom_call.1} parent=0
    _
  %s8 = ssub.s32 1, %s6
  %s9 = scalar_select 0, %s8, %s6
  $region1: #{tpu_custom_call.1} parent=0
    #allocation5 [shape = 'u8[32768]{0}', space=vmem, size = 0x8000, scoped, tag = 'input window, operand 1, single buffered']
    #allocation6 [shape = 's32[1]{0}', space=sflag, size = 0x4, scoped, tag = 'scoped memory for tpu_custom_call.1']
    %10 = vsyncpa [#allocation6], 0
    // Predicated region
    $region2: #{tpu_custom_call.1} parent=1 // pred_check
      _
    $region3: #{tpu_custom_call.1} parent=1 // pred_check_branch
      %12 = sbr.rel (0) target = $region5
    $region4: #{tpu_custom_call.1} parent=1 // pred_region
      _
    $region5: #{tpu_custom_call.1} parent=1 // pred_fallthru
      _
    // Predicated region
    $region6: #{tpu_custom_call.1} parent=1 // pred_check
      _
    $region7: #{tpu_custom_call.1} parent=1 // pred_check_branch
      %14 = sbr.rel (0) target = $region9
    $region8: #{tpu_custom_call.1} parent=1 // pred_region
      %s16 = ssub.s32 1024, 1024
      %17 = vsyncadd [#allocation6], %s16
      %s18 = sshll.u32 [#allocation5], 4
      %s19 = int_to_ptr.vmem [resolvable:$true] %s18
      %24 = dma.hbm_to_vmem [thread:$0]  %s1, 1024, %s19, [#allocation6], 64, 64, 4
    $region9: #{tpu_custom_call.1} parent=1 // pred_fallthru
      _
    // Predicated region
    $region10: #{tpu_custom_call.1} parent=1 // pred_check
      _
    $region11: #{tpu_custom_call.1} parent=1 // pred_check_branch
      %26 = sbr.rel (0) target = $region13
    $region12: #{tpu_custom_call.1} parent=1 // pred_region
      _
    $region13: #{tpu_custom_call.1} parent=1 // pred_fallthru
      _
    // Predicated region
    $region14: #{tpu_custom_call.1} parent=1 // pred_check
      _
    $region15: #{tpu_custom_call.1} parent=1 // pred_check_branch
      %28 = sbr.rel (0) target = $region17
    $region16: #{tpu_custom_call.1} parent=1 // pred_region
      _
    $region17: #{tpu_custom_call.1} parent=1 // pred_fallthru
      _
    // Predicated region
    $region18: #{tpu_custom_call.1} parent=1 // pred_check
      _
    $region19: #{tpu_custom_call.1} parent=1 // pred_check_branch
      %30 = sbr.rel (0) target = $region21
    $region20: #{tpu_custom_call.1} parent=1 // pred_region
      _
    $region21: #{tpu_custom_call.1} parent=1 // pred_fallthru
      _
    // Predicated region
    $region22: #{tpu_custom_call.1} parent=1 // pred_check
      _
    $region23: #{tpu_custom_call.1} parent=1 // pred_check_branch
      %32 = sbr.rel (0) target = $region25
    $region24: #{tpu_custom_call.1} parent=1 // pred_region
      %33 = dma.done [#allocation6], 1024
    $region25: #{tpu_custom_call.1} parent=1 // pred_fallthru
      _
    %p35 = scmp.eq.s32.totalorder 0, 0
    // Predicated region
    $region26: #{tpu_custom_call.1} parent=1 // pred_check
      %p36 = pneg %p35
    $region27: #{tpu_custom_call.1} parent=1 // pred_check_branch
      %38 = sbr.rel (%p36) target = $region29
    $region28: #{tpu_custom_call.1} parent=1 // pred_region
      %vm39 = vcmask 7168
      %40 = vst.msk [vmem:[#allocation2] sm:$0xff] %vm39, -1e+30
      %41 = vst.msk [vmem:[#allocation2 + $0x8] sm:$0xff] %vm39, -1e+30
      %42 = vst.msk [vmem:[#allocation3] sm:$0xff] %vm39, 0.0
      %43 = vst.msk [vmem:[#allocation3 + $0x8] sm:$0xff] %vm39, 0.0
      %44 = vst.msk [vmem:[#allocation4] sm:$0xff] %vm39, 0.0
      %45 = vst.msk [vmem:[#allocation4 + $0x8] sm:$0xff] %vm39, 0.0
    $region29: #{tpu_custom_call.1} parent=1 // pred_fallthru
      _
    %v46 = vld [vmem:[%s0] sm:$0xf]
    %v47 = vld [vmem:[%s0 + $0x4] sm:$0xf]
    %v48 = vld [vmem:[#allocation5] sm:$0xf]
    %v49 = vld [vmem:[#allocation5 + $0x4] sm:$0xf]
    %v50 = vld [vmem:[#allocation5 + $0x8] sm:$0xf]
    %v51 = vld [vmem:[#allocation5 + $0xc] sm:$0xf]
    %v52 = vld [vmem:[#allocation5 + $0x10] sm:$0xf]
    %v53 = vld [vmem:[#allocation5 + $0x14] sm:$0xf]
    %v54 = vld [vmem:[#allocation5 + $0x18] sm:$0xf]
    %v55 = vld [vmem:[#allocation5 + $0x1c] sm:$0xf]
    %v56 = vld [vmem:[#allocation5 + $0x20] sm:$0xf]
    %v57 = vld [vmem:[#allocation5 + $0x24] sm:$0xf]
    %v58 = vld [vmem:[#allocation5 + $0x28] sm:$0xf]
    %v59 = vld [vmem:[#allocation5 + $0x2c] sm:$0xf]
    %v60 = vld [vmem:[#allocation5 + $0x30] sm:$0xf]
    %v61 = vld [vmem:[#allocation5 + $0x34] sm:$0xf]
    %v62 = vld [vmem:[#allocation5 + $0x38] sm:$0xf]
    %v63 = vld [vmem:[#allocation5 + $0x3c] sm:$0xf]
    %v64 = vld [vmem:[%s2] sm:$0x1]
    %v66 = vlaneseq
    %v67 = vshrl.u32 %v66, 7
    %v68 = vsub.s32 0, %v67
    %v69 = vrot.slane %v64, %v68
    %v73 = vunpack.c.l.b16 %v46
    %v74 = vunpack.c.l.b16 %v47
    %v75 = vpack.c.b16 %v74, %v73
    %v93 = vunpack.c.l.b16 %v48
    %v94 = vunpack.c.l.b16 %v49
    %v95 = vunpack.c.l.b16 %v50
    %v96 = vunpack.c.l.b16 %v51
    %v97 = vunpack.c.l.b16 %v52
    %v98 = vunpack.c.l.b16 %v53
    %v99 = vunpack.c.l.b16 %v54
    %v100 = vunpack.c.l.b16 %v55
    %v101 = vunpack.c.l.b16 %v56
    %v102 = vunpack.c.l.b16 %v57
    %v103 = vunpack.c.l.b16 %v58
    %v104 = vunpack.c.l.b16 %v59
    %v105 = vunpack.c.l.b16 %v60
    %v106 = vunpack.c.l.b16 %v61
    %v107 = vunpack.c.l.b16 %v62
    %v108 = vunpack.c.l.b16 %v63
    %v109 = vpack.c.b16 %v94, %v93
    %v110 = vpack.c.b16 %v96, %v95
    %v111 = vpack.c.b16 %v98, %v97
    %v112 = vpack.c.b16 %v100, %v99
    %v113 = vpack.c.b16 %v102, %v101
    %v114 = vpack.c.b16 %v104, %v103
    %v115 = vpack.c.b16 %v106, %v105
    %v116 = vpack.c.b16 %v108, %v107
    %125 = vmatprep.subr.bf16.mxu0 0
    %126 = vmatpush1.bf16.msra.mxu0 %v116
    %127 = vmatprep.subr.bf16.mxu0 0
    %128 = vmatpush1.bf16.msra.mxu0 %v115
    %129 = vmatprep.subr.bf16.mxu0 0
    %130 = vmatpush1.bf16.msra.mxu0 %v114
    %131 = vmatprep.subr.bf16.mxu0 0
    %132 = vmatpush1.bf16.msra.mxu0 %v113
    %133 = vmatprep.subr.bf16.mxu0 0
    %134 = vmatpush1.bf16.msra.mxu0 %v112
    %135 = vmatprep.subr.bf16.mxu0 0
    %136 = vmatpush1.bf16.msra.mxu0 %v111
    %137 = vmatprep.subr.bf16.mxu0 0
    %138 = vmatpush1.bf16.msra.mxu0 %v110
    %139 = vmatprep.subr.bf16.mxu0 0
    %140 = vmatpush1.bf16.msra.mxu0 %v109
    %141 = vmatprep.subr.bf16.mxu0 0
    %142 = vmatpush2.bf16.msra.mxu0 0
    %143 = vmatprep.subr.bf16.mxu0 0
    %144 = vmatpush2.bf16.msra.mxu0 0
    %145 = vmatprep.subr.bf16.mxu0 0
    %146 = vmatpush2.bf16.msra.mxu0 0
    %147 = vmatprep.subr.bf16.mxu0 0
    %148 = vmatpush2.bf16.msra.mxu0 0
    %149 = vmatprep.subr.bf16.mxu0 0
    %150 = vmatpush2.bf16.msra.mxu0 0
    %151 = vmatprep.subr.bf16.mxu0 0
    %152 = vmatpush2.bf16.msra.mxu0 0
    %153 = vmatprep.subr.bf16.mxu0 0
    %154 = vmatpush2.bf16.msra.mxu0 0
    %155 = vmatprep.subr.bf16.mxu0 0
    %156 = vmatpush2.bf16.msra.mxu0 0
    %157 = vmatprep.mubr.bf16.mxu0 0
    %158 = vmatmul.mubr.bf16.gmra.mxu0 %v75
    %v159 = vpop.f32.mrf.mxu0
    %v160 = vadd.f32 %v69, %v159
    %v161 = vpop.f32.mrf.mxu0
    %v162 = vpop.f32.mrf.mxu0
    %v163 = vadd.f32 %v69, %v162
    %v164 = vpop.f32.mrf.mxu0
    %165 = vdwg.mxu0
    %v166 = vld [vmem:[#allocation2] sm:$0xff]
    %v167 = vld [vmem:[#allocation2 + $0x8] sm:$0xff]
    %168 = vmax.xlane.f32.xlu0 %v160
    %v169 = vpop.xlane.xlu0 %168
    %170 = vmax.xlane.f32.xlu0 %v163
    %v171 = vpop.xlane.xlu0 %170
    %v172 = vmax.f32 %v166, %v169
    %v173 = vmax.f32 %v167, %v171
    %v174 = vsub.f32 %v166, %v172
    %v175 = vsub.f32 %v167, %v173
    %v176 = vmul.f32 %v174, 1.442695
    %v177 = vpow.pop %v176
    %v178 = vmul.f32 %v175, 1.442695
    %v179 = vpow.pop %v178
    %v180 = vld [vmem:[#allocation3] sm:$0xff]
    %v181 = vld [vmem:[#allocation3 + $0x8] sm:$0xff]
    %v182 = vmul.f32 %v177, %v180
    %v183 = vmul.f32 %v179, %v181
    %185 = vset.pattern.permute.xlu0 0
    %186 = vperm.xlu0 %185, %v172
    %v187 = vpop.permute.xlu0 %186
    %190 = vset.pattern.permute.xlu0 0
    %191 = vperm.xlu0 %190, %v173
    %v192 = vpop.permute.xlu0 %191
    %v194 = vsub.f32 %v160, %v187
    %v195 = vsub.f32 %v163, %v192
    %v196 = vmul.f32 %v194, 1.442695
    %v197 = vpow.pop %v196
    %v198 = vmul.f32 %v195, 1.442695
    %v199 = vpow.pop %v198
    %200 = vadd.xlane.f32.xlu0 %v197
    %v201 = vpop.xlane.xlu0 %200
    %202 = vadd.xlane.f32.xlu0 %v199
    %v203 = vpop.xlane.xlu0 %202
    %v204 = vadd.f32 %v182, %v201
    %v205 = vadd.f32 %v183, %v203
    %vm206 = vcmask 7168
    %207 = vst.msk [vmem:[#allocation3] sm:$0xff] %vm206, %v204
    %208 = vst.msk [vmem:[#allocation3 + $0x8] sm:$0xff] %vm206, %v205
    %209 = vst.msk [vmem:[#allocation2] sm:$0xff] %vm206, %v172
    %210 = vst.msk [vmem:[#allocation2 + $0x8] sm:$0xff] %vm206, %v173
    %s211 = smul.u32 0, 128
    %v212 = vlaneseq
    %v213 = vand.u32 %v212, 127
    %v214 = vstv %s211
    %v215 = vadd.s32 %v214, %v213
    %v216 = vld [vmem:[#allocation4] sm:$0xff]
    %v217 = vld [vmem:[#allocation4 + $0x8] sm:$0xff]
    %v218 = vld [vmem:[%s3] sm:$0xff]
    %v219 = vld [vmem:[%s3 + $0x8] sm:$0xff]
    %220 = vset.pattern.permute.xlu0 0
    %221 = vperm.xlu0 %220, %v218
    %v222 = vpop.permute.xlu0 %221
    %223 = vset.pattern.permute.xlu0 0
    %224 = vperm.xlu0 %223, %v219
    %v225 = vpop.permute.xlu0 %224
    %vm226 = vcmp.eq.s32.totalorder %v215, %v222
    %vm227 = vcmp.eq.s32.totalorder %v215, %v225
    %v228 = vsel %vm226, %v160, 0.0
    %v229 = vsel %vm227, %v163, 0.0
    %230 = vadd.xlane.f32.xlu0 %v228
    %v231 = vpop.xlane.xlu0 %230
    %232 = vadd.xlane.f32.xlu0 %v229
    %v233 = vpop.xlane.xlu0 %232
    %v234 = vadd.f32 %v216, %v231
    %v235 = vadd.f32 %v217, %v233
    %236 = vst.msk [vmem:[#allocation4] sm:$0xff] %vm206, %v234
    %237 = vst.msk [vmem:[#allocation4 + $0x8] sm:$0xff] %vm206, %v235
    // Predicated region
    $region30: #{tpu_custom_call.1} parent=1 // pred_check
      %p238 = pneg %p35
    $region31: #{tpu_custom_call.1} parent=1 // pred_check_branch
      %240 = sbr.rel (%p238) target = $region33
    $region32: #{tpu_custom_call.1} parent=1 // pred_region
      %v241 = vld [vmem:[#allocation2] sm:$0xff]
      %v242 = vld [vmem:[#allocation2 + $0x8] sm:$0xff]
      %v243 = vld [vmem:[#allocation3] sm:$0xff]
      %v244 = vld [vmem:[#allocation3 + $0x8] sm:$0xff]
      %v245 = vlog2.pop %v243
      %v246 = vmul.f32 %v245, 0.6931472
      %v247 = vlog2.pop %v244
      %v248 = vmul.f32 %v247, 0.6931472
      %v249 = vadd.f32 %v241, %v246
      %v250 = vadd.f32 %v242, %v248
      %v251 = vld [vmem:[#allocation4] sm:$0xff]
      %v252 = vld [vmem:[#allocation4 + $0x8] sm:$0xff]
      %v253 = vsub.f32 %v249, %v251
      %v254 = vsub.f32 %v250, %v252
      %v255 = vld [vmem:[%s4] sm:$0xff]
      %v256 = vld [vmem:[%s4 + $0x8] sm:$0xff]
      %v257 = vsub.f32 %v249, %v255
      %v258 = vsub.f32 %v250, %v256
      %v259 = vmul.f32 %v253, 0.9
      %v260 = vmul.f32 %v254, 0.9
      %v261 = vmul.f32 %v257, 0.1
      %v262 = vmul.f32 %v258, 0.1
      %v263 = vadd.f32 %v259, %v261
      %v264 = vadd.f32 %v260, %v262
      %v265 = vld [vmem:[%s3] sm:$0xff]
      %v266 = vld [vmem:[%s3 + $0x8] sm:$0xff]
      %vm267 = vcmp.ne.s32.totalorder %v265, 4294967196
      %vm268 = vcmp.ne.s32.totalorder %v266, 4294967196
      %v269 = vsel %vm267, %v263, 0.0
      %v270 = vsel %vm268, %v264, 0.0
      %271 = vst.msk [vmem:[%s5] sm:$0xff] %vm206, %v269
      %272 = vst.msk [vmem:[%s5 + $0x8] sm:$0xff] %vm206, %v270
    $region33: #{tpu_custom_call.1} parent=1 // pred_fallthru
      _
    // Predicated region
    $region34: #{tpu_custom_call.1} parent=1 // pred_check
      _
    $region35: #{tpu_custom_call.1} parent=1 // pred_check_branch
      %274 = sbr.rel (0) target = $region37
    $region36: #{tpu_custom_call.1} parent=1 // pred_region
      _
    $region37: #{tpu_custom_call.1} parent=1 // pred_fallthru
      _
    // Predicated region
    $region38: #{tpu_custom_call.1} parent=1 // pred_check
      _
    $region39: #{tpu_custom_call.1} parent=1 // pred_check_branch
      %276 = sbr.rel (0) target = $region41
    $region40: #{tpu_custom_call.1} parent=1 // pred_region
      _
    $region41: #{tpu_custom_call.1} parent=1 // pred_fallthru
      _
    %277 = vsyncpa [#allocation6], 1

</llo_original>
